<compile_context>
chip_gen: v7x
topology: tpu7x:2x2x1
jax: 0.10.0
libtpu: 0.0.40
codegen_flags: <defaults>
</compile_context>

<pallas_src>
import jax
import jax.numpy as jnp
from jax import lax
from jax.experimental import pallas as pl
from jax.experimental.pallas import tpu as pltpu
import numpy as np

# ---- small, module-consistent configuration -------------------------------
C_IN = 4              # input_channels
C_MID = 28            # intermediate_channels
C_OUT = 32            # output_channels
CC = C_IN + C_MID     # concat channels = 32
R = CC // 8           # reduced_channels = 4
H = W = 16
HW = H * W
B = 2
EPS = 1e-5


# ---- Pallas kernel: fused MBH forward for one batch tile --------------------
def mbh_kernel(patches_ref,   # (9*C_IN, TB*HW)   bf16 im2col patches (batch tile)
               conv_ref,      # (CC, 9*C_IN+1)    bf16 fused dw+dense conv, BN folded, bias col
               pool_ref,      # (TB*HW, TB)       f32 block-diag avg-pool matrix (1/HW)
               bcast_ref,     # (TB, TB*HW)       f32 0/1 segment matrix (per-image broadcast)
               attn_ref,      # (2R+CC, 2*CC+1)   f32 fused fc_avg/fc_max (rows 0:2R = layer1)
               final_ref,     # (C_OUT, CC+1)     f32 [wf^T | bf]
               o_ref):        # (TB, C_OUT, HW)   channel-major, lane-dense output
    tb = o_ref.shape[0]
    k9 = patches_ref.shape[0]

    # branch1 + branch2 + BN + ReLU + concat: ONE bf16 MXU matmul, bias on VPU
    conv_w = conv_ref[:, :k9]                                    # (CC, 36) bf16
    conv_b = conv_ref[:, k9:k9 + 1].astype(jnp.float32)          # (CC, 1)
    combined = jnp.maximum(
        jnp.dot(conv_w, patches_ref[...],
                preferred_element_type=jnp.float32) + conv_b, 0.0)   # (CC, TB*HW) f32

    # global avg-pool on the MXU; max-pool as per-image 256-lane reductions
    avg = jnp.dot(combined, pool_ref[...],
                  preferred_element_type=jnp.float32)            # (CC, TB)
    mx = jnp.concatenate(
        [jnp.max(combined[:, b * HW:(b + 1) * HW], axis=1, keepdims=True)
         for b in range(tb)], axis=1)                            # (CC, TB)
    z = jnp.concatenate([avg, mx], axis=0)                       # (2*CC, TB)

    # fused channel-attention MLP: fc_avg & fc_max as one block-diagonal net
    a1w = attn_ref[0:2 * R, 0:2 * CC]                            # (2R, 2CC)
    a1b = attn_ref[0:2 * R, 2 * CC:2 * CC + 1]                   # (2R, 1)
    a2w = attn_ref[2 * R:2 * R + CC, 0:2 * R]                    # (CC, 2R)
    a2b = attn_ref[2 * R:2 * R + CC, 2 * R:2 * R + 1]            # (CC, 1)
    hdn = jnp.maximum(jnp.dot(a1w, z, preferred_element_type=jnp.float32) + a1b, 0.0)
    f = jnp.dot(a2w, hdn, preferred_element_type=jnp.float32) + a2b
    cw = jax.nn.sigmoid(f)                                       # (CC, TB)

    # per-image channel-weight broadcast (MXU), re-weight (VPU), final 1x1 conv
    # as ONE matmul over the whole tile, lane-dense 256-wide stores.
    cw_full = jnp.dot(cw, bcast_ref[...],
                      preferred_element_type=jnp.float32)        # (CC, TB*HW)
    weighted = combined * cw_full                                # (CC, TB*HW)
    wf = final_ref[:, 0:CC]                                      # (C_OUT, CC)
    bf = final_ref[:, CC:CC + 1]                                 # (C_OUT, 1)
    res = jnp.dot(wf, weighted,
                  preferred_element_type=jnp.float32) + bf       # (C_OUT, TB*HW)
    for b in range(tb):
        o_ref[b] = res[:, b * HW:(b + 1) * HW].astype(o_ref.dtype)


def _pick_tile_b(bn):
    # Largest convenient divisor of the batch (cap keeps the pool matmul small
    # and the per-core VMEM footprint well inside v7x's 64 MiB).
    for tb in (32, 16, 8, 4, 2, 1):
        if tb <= bn and bn % tb == 0:
            return tb
    return bn


def mbh_pallas(x_nchw, conv_blob, attn_blob, final_blob):
    bn = x_nchw.shape[0]
    tb = _pick_tile_b(bn)
    n_tiles = bn // tb

    # im2col (wrapper, fuses under jit): (9*C_IN, B*HW) bf16,
    # row order (kh, kw, c), column order (b, h, w).  No bias row.
    x_b = x_nchw.astype(jnp.bfloat16)
    x_pad = jnp.pad(x_b, ((0, 0), (0, 0), (1, 1), (1, 1)))        # (B, C, H+2, W+2)
    taps = [x_pad[:, :, kh:kh + H, kw:kw + W]
            for kh in range(3) for kw in range(3)]                # each (B, C, H, W)
    pt = jnp.stack(taps, axis=1).reshape(bn, 9 * C_IN, HW)        # (B, 9*C, HW)
    patches = jnp.transpose(pt, (1, 0, 2)).reshape(9 * C_IN, bn * HW)   # bf16

    conv_b16 = conv_blob.astype(jnp.bfloat16)                     # (CC, 37)

    # constant per-tile pooling / broadcast matrices (trace-time constants)
    pm = np.zeros((tb * HW, tb), np.float32)
    bm = np.zeros((tb, tb * HW), np.float32)
    for b in range(tb):
        pm[b * HW:(b + 1) * HW, b] = 1.0 / HW
        bm[b, b * HW:(b + 1) * HW] = 1.0
    pool_mat = jnp.asarray(pm)
    bcast_mat = jnp.asarray(bm)

    n_cols = bn * HW
    cost = pl.CostEstimate(
        flops=int(2 * CC * 9 * C_IN * n_cols          # fused conv matmul
                  + 2 * C_OUT * CC * n_cols           # final 1x1 conv
                  + 2 * CC * n_cols * tb              # avg-pool matmul
                  + 2 * CC * tb * n_cols              # cw broadcast matmul
                  + 8 * R * CC * bn + 8 * CC * n_cols),
        transcendentals=int(CC * bn),
        bytes_accessed=int(patches.size * 2 + conv_b16.size * 2
                           + pool_mat.size * 4 + bcast_mat.size * 4
                           + attn_blob.size * 4 + final_blob.size * 4
                           + bn * C_OUT * HW * 4))

    out = pl.pallas_call(
        mbh_kernel,
        out_shape=jax.ShapeDtypeStruct((bn, C_OUT, HW), jnp.float32),
        grid=(n_tiles,),
        in_specs=[
            pl.BlockSpec((9 * C_IN, tb * HW), lambda i: (0, i)),   # batch-tile columns
            pl.BlockSpec(conv_b16.shape, lambda i: (0, 0)),
            pl.BlockSpec(pool_mat.shape, lambda i: (0, 0)),
            pl.BlockSpec(bcast_mat.shape, lambda i: (0, 0)),
            pl.BlockSpec(attn_blob.shape, lambda i: (0, 0)),
            pl.BlockSpec(final_blob.shape, lambda i: (0, 0)),
        ],
        out_specs=pl.BlockSpec((tb, C_OUT, HW), lambda i: (i, 0, 0)),
        compiler_params=pltpu.CompilerParams(dimension_semantics=("parallel",)),
        cost_estimate=cost,
    )(patches, conv_b16, pool_mat, bcast_mat, attn_blob, final_blob)
    # (B, C_OUT, HW) -> (B, C_OUT, H, W): pure reshape, no transpose needed
    return out.reshape(bn, C_OUT, H, W)


# ---- deterministic parameter construction ----------------------------------
def make_params():
    key = jax.random.PRNGKey(0)
    ks = jax.random.split(key, 24)
    s = 0.1

    def bn_fold(kg, kb, km, kv, c):
        gamma = 1.0 + s * jax.random.normal(kg, (c,), jnp.float32)
        beta = s * jax.random.normal(kb, (c,), jnp.float32)
        rmean = s * jax.random.normal(km, (c,), jnp.float32)
        rvar = 1.0 + s * jnp.abs(jax.random.normal(kv, (c,), jnp.float32))
        scale = gamma / jnp.sqrt(rvar + EPS)
        bias = beta - rmean * scale
        return scale, bias                                       # (c,)

    dw_w = s * jax.random.normal(ks[0], (3, 3, 1, C_IN), jnp.float32)
    dw_s, dw_b = bn_fold(ks[1], ks[2], ks[3], ks[4], C_IN)
    w2_hwio = s * jax.random.normal(ks[5], (3, 3, C_IN, C_MID), jnp.float32)
    s2, bb2 = bn_fold(ks[6], ks[7], ks[8], ks[9], C_MID)

    wa1 = s * jax.random.normal(ks[10], (CC, R), jnp.float32)
    ba1 = s * jax.random.normal(ks[11], (R,), jnp.float32)
    wa2 = s * jax.random.normal(ks[12], (R, CC), jnp.float32)
    ba2 = s * jax.random.normal(ks[13], (CC,), jnp.float32)
    wm1 = s * jax.random.normal(ks[14], (CC, R), jnp.float32)
    bm1 = s * jax.random.normal(ks[15], (R,), jnp.float32)
    wm2 = s * jax.random.normal(ks[16], (R, CC), jnp.float32)
    bm2 = s * jax.random.normal(ks[17], (CC,), jnp.float32)

    wf = s * jax.random.normal(ks[18], (CC, C_OUT), jnp.float32)
    bf = s * jax.random.normal(ks[19], (C_OUT,), jnp.float32)

    return dict(dw_w=dw_w, dw_s=dw_s, dw_b=dw_b, w2_hwio=w2_hwio, s2=s2,
                bb2=bb2, wa1=wa1, ba1=ba1, wa2=wa2, ba2=ba2, wm1=wm1,
                bm1=bm1, wm2=wm2, bm2=bm2, wf=wf, bf=bf)


def pack_params(p):
    """Fold BN + concat + biases into 3 channel-major parameter blobs."""
    # --- conv blob: (CC, 9*C_IN + 1), last column = fused bias ---------------
    dw_flat = p['dw_w'].reshape(9, C_IN)                         # [(kh,kw), c]
    idx = jnp.arange(C_IN)
    w_dw = jnp.zeros((9, C_IN, C_IN), jnp.float32)
    w_dw = w_dw.at[:, idx, idx].set(dw_flat)                     # block-sparse depthwise
    w_dw = w_dw.reshape(9 * C_IN, C_IN) * p['dw_s'][None, :]     # BN scale folded
    w_dense = p['w2_hwio'].reshape(9 * C_IN, C_MID) * p['s2'][None, :]
    w_comb = jnp.concatenate([w_dw, w_dense], axis=1)            # (36, CC)
    b_comb = jnp.concatenate([p['dw_b'], p['bb2']])              # (CC,)
    conv_blob = jnp.concatenate([w_comb, b_comb[None, :]], axis=0).T   # (CC, 37)

    # --- attention blob: (2R + CC, 2*CC + 1) ---------------------------------
    w1 = jnp.zeros((2 * CC, 2 * R), jnp.float32)
    w1 = w1.at[:CC, :R].set(p['wa1']).at[CC:, R:].set(p['wm1'])  # block diagonal
    b1 = jnp.concatenate([p['ba1'], p['bm1']])                   # (2R,)
    a1 = jnp.concatenate([w1.T, b1[:, None]], axis=1)            # (2R, 2CC+1)
    w2 = jnp.concatenate([p['wa2'], p['wm2']], axis=0)           # (2R, CC)
    b2 = p['ba2'] + p['bm2']                                     # (CC,)
    a2 = jnp.concatenate([w2.T, b2[:, None]], axis=1)            # (CC, 2R+1)
    a2 = jnp.pad(a2, ((0, 0), (0, (2 * CC + 1) - (2 * R + 1))))
    attn_blob = jnp.concatenate([a1, a2], axis=0)                # (2R+CC, 2CC+1)

    # --- final 1x1 conv blob: (C_OUT, CC + 1) --------------------------------
    final_blob = jnp.concatenate([p['wf'].T, p['bf'][:, None]], axis=1)  # (C_OUT, CC+1)
    return conv_blob, attn_blob, final_blob


# ---- pure-JAX reference (mirrors the PyTorch forward, NCHW, f32) ------------
def mbh_reference(x, p):
    dw_oihw = jnp.transpose(p['dw_w'], (3, 2, 0, 1))             # (C_IN, 1, 3, 3)
    b1 = lax.conv_general_dilated(x, dw_oihw, (1, 1), 'SAME',
                                  feature_group_count=C_IN,
                                  dimension_numbers=('NCHW', 'OIHW', 'NCHW'))
    b1 = jnp.maximum(b1 * p['dw_s'].reshape(1, C_IN, 1, 1)
                     + p['dw_b'].reshape(1, C_IN, 1, 1), 0.0)

    w2_oihw = jnp.transpose(p['w2_hwio'], (3, 2, 0, 1))          # (C_MID, C_IN, 3, 3)
    b2 = lax.conv_general_dilated(x, w2_oihw, (1, 1), 'SAME',
                                  dimension_numbers=('NCHW', 'OIHW', 'NCHW'))
    b2 = jnp.maximum(b2 * p['s2'].reshape(1, C_MID, 1, 1)
                     + p['bb2'].reshape(1, C_MID, 1, 1), 0.0)

    comb = jnp.concatenate([b1, b2], axis=1)                     # (B, CC, H, W)
    avg = jnp.mean(comb, axis=(2, 3))
    mx = jnp.max(comb, axis=(2, 3))
    fa = jnp.maximum(avg @ p['wa1'] + p['ba1'][None, :], 0.0) @ p['wa2'] + p['ba2'][None, :]
    fm = jnp.maximum(mx @ p['wm1'] + p['bm1'][None, :], 0.0) @ p['wm2'] + p['bm2'][None, :]
    cw = jax.nn.sigmoid(fa + fm)[:, :, None, None]
    weighted = comb * cw
    out = jnp.einsum('bchw,co->bohw', weighted, p['wf']) \
        + p['bf'].reshape(1, C_OUT, 1, 1)
    return out


if __name__ == "__main__":
    raw = make_params()
    conv_blob, attn_blob, final_blob = pack_params(raw)

    x = jax.random.normal(jax.random.split(jax.random.PRNGKey(0), 2)[1],
                          (B, C_IN, H, W), jnp.float32)

    fwd = jax.jit(mbh_pallas)        # im2col HLOs fuse with the custom call
    out = jax.block_until_ready(fwd(x, conv_blob, attn_blob, final_blob))

    ref = mbh_reference(x, raw)
    # bf16 inputs to the big matmul (f32 accumulation) -> loosened tolerance
    np.testing.assert_allclose(np.asarray(out), np.asarray(ref),
                               rtol=3e-2, atol=1e-2)
    assert out.shape == (B, C_OUT, H, W)
    print("KERNEL_OK")
</pallas_src>

<mosaic_0001>
module attributes {stable_mosaic.version = 11 : i64} {
  func.func @mbh_kernel(%arg0: i32, %arg1: memref<36x512xbf16, #tpu.memory_space<vmem>>, %arg2: memref<32x37xbf16, #tpu.memory_space<vmem>>, %arg3: memref<512x2xf32, #tpu.memory_space<vmem>>, %arg4: memref<2x512xf32, #tpu.memory_space<vmem>>, %arg5: memref<40x65xf32, #tpu.memory_space<vmem>>, %arg6: memref<32x33xf32, #tpu.memory_space<vmem>>, %arg7: memref<2x32x256xf32, #tpu.memory_space<vmem>>) attributes {dimension_semantics = [#tpu.dimension_semantics<parallel>], iteration_bounds = array<i64: 1>, scalar_prefetch = 0 : i64, scratch_operands = 0 : i64, tpu.core_type = #tpu.core_type<tc>, window_params = [{transform_indices = @transform_0, window_bounds = array<i64: 36, 512>}, {pipeline_mode = #tpu.pipeline_mode<synchronous>, transform_indices = @transform_1, window_bounds = array<i64: 32, 37>}, {pipeline_mode = #tpu.pipeline_mode<synchronous>, transform_indices = @transform_2, window_bounds = array<i64: 512, 2>}, {pipeline_mode = #tpu.pipeline_mode<synchronous>, transform_indices = @transform_3, window_bounds = array<i64: 2, 512>}, {pipeline_mode = #tpu.pipeline_mode<synchronous>, transform_indices = @transform_4, window_bounds = array<i64: 40, 65>}, {pipeline_mode = #tpu.pipeline_mode<synchronous>, transform_indices = @transform_5, window_bounds = array<i64: 32, 33>}, {transform_indices = @transform_6, window_bounds = array<i64: 2, 32, 256>}]} {
    %c0 = arith.constant 0 : index
    %c0_0 = arith.constant 0 : index
    %0 = vector.load %arg2[%c0, %c0_0] : memref<32x37xbf16, #tpu.memory_space<vmem>>, vector<32x36xbf16>
    %c0_1 = arith.constant 0 : index
    %c36 = arith.constant 36 : index
    %1 = vector.load %arg2[%c0_1, %c36] : memref<32x37xbf16, #tpu.memory_space<vmem>>, vector<32x1xbf16>
    %2 = arith.extf %1 : vector<32x1xbf16> to vector<32x1xf32>
    %c0_2 = arith.constant 0 : index
    %c0_3 = arith.constant 0 : index
    %3 = vector.load %arg1[%c0_2, %c0_3] : memref<36x512xbf16, #tpu.memory_space<vmem>>, vector<36x512xbf16>
    %cst = arith.constant dense<0.000000e+00> : vector<32x512xf32>
    %4 = tpu.matmul %0, %3, %cst {dimension_numbers = #tpu.dot_dimension_numbers<[1], [0], [0], [1], [0, 0, 1, 1], [], []>} : vector<32x36xbf16>, vector<36x512xbf16>, vector<32x512xf32> -> vector<32x512xf32>
    %5 = vector.broadcast %2 : vector<32x1xf32> to vector<32x512xf32>
    %6 = arith.addf %4, %5 : vector<32x512xf32>
    %cst_4 = arith.constant 0.000000e+00 : f32
    %7 = vector.broadcast %cst_4 : f32 to vector<32x512xf32>
    %8 = arith.maximumf %6, %7 : vector<32x512xf32>
    %c0_5 = arith.constant 0 : index
    %c0_6 = arith.constant 0 : index
    %9 = vector.load %arg3[%c0_5, %c0_6] : memref<512x2xf32, #tpu.memory_space<vmem>>, vector<512x2xf32>
    %cst_7 = arith.constant dense<0.000000e+00> : vector<32x2xf32>
    %10 = tpu.matmul %8, %9, %cst_7 {dimension_numbers = #tpu.dot_dimension_numbers<[1], [0], [0], [1], [0, 0, 1, 1], [], []>} : vector<32x512xf32>, vector<512x2xf32>, vector<32x2xf32> -> vector<32x2xf32>
    %11 = vector.extract_strided_slice %8 {offsets = [0, 0], sizes = [32, 256], strides = [1, 1]} : vector<32x512xf32> to vector<32x256xf32>
    %cst_8 = arith.constant dense<0xFF800000> : vector<32xf32>
    %12 = vector.multi_reduction <maximumf>, %11, %cst_8 [1] : vector<32x256xf32> to vector<32xf32>
    %13 = vector.shape_cast %12 : vector<32xf32> to vector<32x1xf32>
    %14 = vector.extract_strided_slice %8 {offsets = [0, 256], sizes = [32, 256], strides = [1, 1]} : vector<32x512xf32> to vector<32x256xf32>
    %cst_9 = arith.constant dense<0xFF800000> : vector<32xf32>
    %15 = vector.multi_reduction <maximumf>, %14, %cst_9 [1] : vector<32x256xf32> to vector<32xf32>
    %16 = vector.shape_cast %15 : vector<32xf32> to vector<32x1xf32>
    %17 = tpu.concatenate %13, %16 in 1 : vector<32x1xf32>, vector<32x1xf32> -> vector<32x2xf32>
    %18 = tpu.concatenate %10, %17 in 0 : vector<32x2xf32>, vector<32x2xf32> -> vector<64x2xf32>
    %c0_10 = arith.constant 0 : index
    %c0_11 = arith.constant 0 : index
    %19 = vector.load %arg5[%c0_10, %c0_11] : memref<40x65xf32, #tpu.memory_space<vmem>>, vector<8x64xf32>
    %c0_12 = arith.constant 0 : index
    %c64 = arith.constant 64 : index
    %20 = vector.load %arg5[%c0_12, %c64] : memref<40x65xf32, #tpu.memory_space<vmem>>, vector<8x1xf32>
    %c8 = arith.constant 8 : index
    %c0_13 = arith.constant 0 : index
    %21 = vector.load %arg5[%c8, %c0_13] : memref<40x65xf32, #tpu.memory_space<vmem>>, vector<32x8xf32>
    %c8_14 = arith.constant 8 : index
    %c8_15 = arith.constant 8 : index
    %22 = vector.load %arg5[%c8_14, %c8_15] : memref<40x65xf32, #tpu.memory_space<vmem>>, vector<32x1xf32>
    %cst_16 = arith.constant dense<0.000000e+00> : vector<8x2xf32>
    %23 = tpu.matmul %19, %18, %cst_16 {dimension_numbers = #tpu.dot_dimension_numbers<[1], [0], [0], [1], [0, 0, 1, 1], [], []>} : vector<8x64xf32>, vector<64x2xf32>, vector<8x2xf32> -> vector<8x2xf32>
    %24 = vector.broadcast %20 : vector<8x1xf32> to vector<8x2xf32>
    %25 = arith.addf %23, %24 : vector<8x2xf32>
    %cst_17 = arith.constant 0.000000e+00 : f32
    %26 = vector.broadcast %cst_17 : f32 to vector<8x2xf32>
    %27 = arith.maximumf %25, %26 : vector<8x2xf32>
    %cst_18 = arith.constant dense<0.000000e+00> : vector<32x2xf32>
    %28 = tpu.matmul %21, %27, %cst_18 {dimension_numbers = #tpu.dot_dimension_numbers<[1], [0], [0], [1], [0, 0, 1, 1], [], []>} : vector<32x8xf32>, vector<8x2xf32>, vector<32x2xf32> -> vector<32x2xf32>
    %29 = vector.broadcast %22 : vector<32x1xf32> to vector<32x2xf32>
    %30 = arith.addf %28, %29 : vector<32x2xf32>
    %31 = arith.negf %30 : vector<32x2xf32>
    %32 = math.exp %31 : vector<32x2xf32>
    %cst_19 = arith.constant 1.000000e+00 : f32
    %33 = vector.broadcast %cst_19 : f32 to vector<32x2xf32>
    %34 = arith.addf %33, %32 : vector<32x2xf32>
    %35 = arith.divf %33, %34 : vector<32x2xf32>
    %c0_20 = arith.constant 0 : index
    %c0_21 = arith.constant 0 : index
    %36 = vector.load %arg4[%c0_20, %c0_21] : memref<2x512xf32, #tpu.memory_space<vmem>>, vector<2x512xf32>
    %cst_22 = arith.constant dense<0.000000e+00> : vector<32x512xf32>
    %37 = tpu.matmul %35, %36, %cst_22 {dimension_numbers = #tpu.dot_dimension_numbers<[1], [0], [0], [1], [0, 0, 1, 1], [], []>} : vector<32x2xf32>, vector<2x512xf32>, vector<32x512xf32> -> vector<32x512xf32>
    %38 = arith.mulf %8, %37 : vector<32x512xf32>
    %c0_23 = arith.constant 0 : index
    %c0_24 = arith.constant 0 : index
    %39 = vector.load %arg6[%c0_23, %c0_24] : memref<32x33xf32, #tpu.memory_space<vmem>>, vector<32x32xf32>
    %c0_25 = arith.constant 0 : index
    %c32 = arith.constant 32 : index
    %40 = vector.load %arg6[%c0_25, %c32] : memref<32x33xf32, #tpu.memory_space<vmem>>, vector<32x1xf32>
    %cst_26 = arith.constant dense<0.000000e+00> : vector<32x512xf32>
    %41 = tpu.matmul %39, %38, %cst_26 {dimension_numbers = #tpu.dot_dimension_numbers<[1], [0], [0], [1], [0, 0, 1, 1], [], []>} : vector<32x32xf32>, vector<32x512xf32>, vector<32x512xf32> -> vector<32x512xf32>
    %42 = vector.broadcast %40 : vector<32x1xf32> to vector<32x512xf32>
    %43 = arith.addf %41, %42 : vector<32x512xf32>
    %44 = vector.extract_strided_slice %43 {offsets = [0, 0], sizes = [32, 256], strides = [1, 1]} : vector<32x512xf32> to vector<32x256xf32>
    %c0_27 = arith.constant 0 : index
    %c0_28 = arith.constant 0 : index
    %c0_29 = arith.constant 0 : index
    %45 = vector.load %arg7[%c0_27, %c0_28, %c0_29] : memref<2x32x256xf32, #tpu.memory_space<vmem>>, vector<1x32x256xf32>
    %46 = vector.shape_cast %45 : vector<1x32x256xf32> to vector<32x256xf32>
    %47 = vector.shape_cast %44 : vector<32x256xf32> to vector<1x32x256xf32>
    tpu.vector_store %arg7[%c0_27, %c0_28, %c0_29], %47 {strides = array<i32>} : memref<2x32x256xf32, #tpu.memory_space<vmem>>, vector<1x32x256xf32>,
    %48 = vector.extract_strided_slice %43 {offsets = [0, 256], sizes = [32, 256], strides = [1, 1]} : vector<32x512xf32> to vector<32x256xf32>
    %c1 = arith.constant 1 : index
    %c0_30 = arith.constant 0 : index
    %c0_31 = arith.constant 0 : index
    %49 = vector.load %arg7[%c1, %c0_30, %c0_31] : memref<2x32x256xf32, #tpu.memory_space<vmem>>, vector<1x32x256xf32>
    %50 = vector.shape_cast %49 : vector<1x32x256xf32> to vector<32x256xf32>
    %51 = vector.shape_cast %48 : vector<32x256xf32> to vector<1x32x256xf32>
    tpu.vector_store %arg7[%c1, %c0_30, %c0_31], %51 {strides = array<i32>} : memref<2x32x256xf32, #tpu.memory_space<vmem>>, vector<1x32x256xf32>,
    return
  }
  func.func @transform_0(%arg0: i32) -> (i32, i32) {
    %c0_i32 = arith.constant 0 : i32
    %c0_i32_0 = arith.constant 0 : i32
    return %c0_i32, %arg0 : i32, i32
  }
  func.func @transform_1(%arg0: i32) -> (i32, i32) {
    %c0_i32 = arith.constant 0 : i32
    %c0_i32_0 = arith.constant 0 : i32
    %c0_i32_1 = arith.constant 0 : i32
    return %c0_i32, %c0_i32_0 : i32, i32
  }
  func.func @transform_2(%arg0: i32) -> (i32, i32) {
    %c0_i32 = arith.constant 0 : i32
    %c0_i32_0 = arith.constant 0 : i32
    %c0_i32_1 = arith.constant 0 : i32
    return %c0_i32, %c0_i32_0 : i32, i32
  }
  func.func @transform_3(%arg0: i32) -> (i32, i32) {
    %c0_i32 = arith.constant 0 : i32
    %c0_i32_0 = arith.constant 0 : i32
    %c0_i32_1 = arith.constant 0 : i32
    return %c0_i32, %c0_i32_0 : i32, i32
  }
  func.func @transform_4(%arg0: i32) -> (i32, i32) {
    %c0_i32 = arith.constant 0 : i32
    %c0_i32_0 = arith.constant 0 : i32
    %c0_i32_1 = arith.constant 0 : i32
    return %c0_i32, %c0_i32_0 : i32, i32
  }
  func.func @transform_5(%arg0: i32) -> (i32, i32) {
    %c0_i32 = arith.constant 0 : i32
    %c0_i32_0 = arith.constant 0 : i32
    %c0_i32_1 = arith.constant 0 : i32
    return %c0_i32, %c0_i32_0 : i32, i32
  }
  func.func @transform_6(%arg0: i32) -> (i32, i32, i32) {
    %c0_i32 = arith.constant 0 : i32
    %c0_i32_0 = arith.constant 0 : i32
    %c0_i32_1 = arith.constant 0 : i32
    return %arg0, %c0_i32, %c0_i32_0 : i32, i32, i32
  }
}

</mosaic_0001>

<llo_original>
// kernel: mbh_pallas.1
$region0: #{mbh_pallas.1}
  #allocation0 [shape = 'u32[]', space=smem, size = 0x4, offset = 0x4, fixed_abs, tag = 'smem constant byte address 0x4 - core index']
  #allocation1 [shape = 'u32[144,128]{1,0:T(1,128)}', space=vmem, size = 0x12000, scoped, tag = 'internal scratch']
  %s0 = inlined_call_operand.vmem [shape: bf16[36,512], index: 0, kind: input, shape index: {}]
  %s1 = inlined_call_operand.vmem [shape: bf16[32,37], index: 1, kind: input, shape index: {}]
  %s2 = inlined_call_operand.vmem [shape: f32[512,2], index: 2, kind: input, shape index: {}]
  %s3 = inlined_call_operand.vmem [shape: f32[2,512], index: 3, kind: input, shape index: {}]
  %s4 = inlined_call_operand.vmem [shape: f32[40,65], index: 4, kind: input, shape index: {}]
  %s5 = inlined_call_operand.vmem [shape: f32[32,33], index: 5, kind: input, shape index: {}]
  %s6 = inlined_call_operand.vmem [shape: f32[2,32,256], index: 6, kind: output, shape index: {}]
  %s7 = sld [smem:[#allocation0]]
  $region34: #{mbh_pallas.1} parent=0
    _
  %s9 = ssub.s32 1, %s7
  %s10 = scalar_select 0, %s9, %s7
  // Predicated region
  $region2: #{mbh_pallas.1} parent=0 // pred_check
    _
  $region3: #{mbh_pallas.1} parent=0 // pred_check_branch
    %12 = sbr.rel (0) target = $region5
  $region4: #{mbh_pallas.1} parent=0 // pred_region
    _
  $region5: #{mbh_pallas.1} parent=0 // pred_fallthru
    _
  // Predicated region
  $region6: #{mbh_pallas.1} parent=0 // pred_check
    _
  $region7: #{mbh_pallas.1} parent=0 // pred_check_branch
    %14 = sbr.rel (0) target = $region9
  $region8: #{mbh_pallas.1} parent=0 // pred_region
    _
  $region9: #{mbh_pallas.1} parent=0 // pred_fallthru
    _
  // Predicated region
  $region10: #{mbh_pallas.1} parent=0 // pred_check
    _
  $region11: #{mbh_pallas.1} parent=0 // pred_check_branch
    %16 = sbr.rel (0) target = $region13
  $region12: #{mbh_pallas.1} parent=0 // pred_region
    _
  $region13: #{mbh_pallas.1} parent=0 // pred_fallthru
    _
  // Predicated region
  $region14: #{mbh_pallas.1} parent=0 // pred_check
    _
  $region15: #{mbh_pallas.1} parent=0 // pred_check_branch
    %18 = sbr.rel (0) target = $region17
  $region16: #{mbh_pallas.1} parent=0 // pred_region
    _
  $region17: #{mbh_pallas.1} parent=0 // pred_fallthru
    _
  // Predicated region
  $region18: #{mbh_pallas.1} parent=0 // pred_check
    _
  $region19: #{mbh_pallas.1} parent=0 // pred_check_branch
    %20 = sbr.rel (0) target = $region21
  $region20: #{mbh_pallas.1} parent=0 // pred_region
    _
  $region21: #{mbh_pallas.1} parent=0 // pred_fallthru
    _
  // Predicated region
  $region22: #{mbh_pallas.1} parent=0 // pred_check
    _
  $region23: #{mbh_pallas.1} parent=0 // pred_check_branch
    %22 = sbr.rel (0) target = $region25
  $region24: #{mbh_pallas.1} parent=0 // pred_region
    _
  $region25: #{mbh_pallas.1} parent=0 // pred_fallthru
    _
  %v24 = vld [vmem:[%s1] sm:$0xf]
  %v25 = vld [vmem:[%s1 + $0x4] sm:$0xf]
  %v26 = vld [vmem:[%s1 + $0x8] sm:$0xf]
  %v27 = vld [vmem:[%s1 + $0xc] sm:$0xf]
  %v28 = vunpack.c.l.bf16 %v24
  %v29 = vunpack.c.l.bf16 %v25
  %v30 = vunpack.c.l.bf16 %v26
  %v31 = vunpack.c.l.bf16 %v27
  %v32 = vld [vmem:[%s0] sm:$0xff]
  %v33 = vld [vmem:[%s0 + $0x8] sm:$0xff]
  %v34 = vld [vmem:[%s0 + $0x10] sm:$0xff]
  %v35 = vld [vmem:[%s0 + $0x18] sm:$0xff]
  %v36 = vld [vmem:[%s0 + $0x20] sm:$0xff]
  %v37 = vld [vmem:[%s0 + $0x28] sm:$0xff]
  %v38 = vld [vmem:[%s0 + $0x30] sm:$0xff]
  %v39 = vld [vmem:[%s0 + $0x38] sm:$0xff]
  %v40 = vld [vmem:[%s0 + $0x40] sm:$0x33]
  %v41 = vld [vmem:[%s0 + $0x48] sm:$0x33]
  %43 = vset.pattern.permute.xlu0 36
  %44 = vperm.xlu0 %43, %v28
  %v45 = vpop.permute.xlu0 %44
  %48 = vset.pattern.permute.xlu0 36
  %49 = vperm.xlu0 %48, %v29
  %v50 = vpop.permute.xlu0 %49
  %53 = vset.pattern.permute.xlu0 36
  %54 = vperm.xlu0 %53, %v30
  %v55 = vpop.permute.xlu0 %54
  %58 = vset.pattern.permute.xlu0 36
  %59 = vperm.xlu0 %58, %v31
  %v60 = vpop.permute.xlu0 %59
  %v66 = vunpack.c.l.b16 %v24
  %v67 = vunpack.c.l.b16 %v25
  %v68 = vunpack.c.l.b16 %v26
  %v69 = vunpack.c.l.b16 %v27
  %v70 = vpack.c.b16 %v67, %v66
  %v71 = vpack.c.b16 %v69, %v68
  %v82 = vunpack.c.l.b16 %v32
  %v83 = vunpack.c.h.b16 %v32
  %v84 = vunpack.c.l.b16 %v33
  %v85 = vunpack.c.h.b16 %v33
  %v86 = vunpack.c.l.b16 %v34
  %v87 = vunpack.c.h.b16 %v34
  %v88 = vunpack.c.l.b16 %v35
  %v89 = vunpack.c.h.b16 %v35
  %v90 = vunpack.c.l.b16 %v36
  %v91 = vunpack.c.h.b16 %v36
  %v92 = vunpack.c.l.b16 %v37
  %v93 = vunpack.c.h.b16 %v37
  %v94 = vunpack.c.l.b16 %v38
  %v95 = vunpack.c.h.b16 %v38
  %v96 = vunpack.c.l.b16 %v39
  %v97 = vunpack.c.h.b16 %v39
  %v98 = vunpack.c.l.b16 %v40
  %v99 = vunpack.c.h.b16 %v40
  %v100 = vunpack.c.l.b16 %v41
  %v101 = vunpack.c.h.b16 %v41
  %v102 = vpack.c.b16 %v86, %v82
  %v103 = vpack.c.b16 %v87, %v83
  %v104 = vpack.c.b16 %v88, %v84
  %v105 = vpack.c.b16 %v89, %v85
  %v106 = vpack.c.b16 %v94, %v90
  %v107 = vpack.c.b16 %v95, %v91
  %v108 = vpack.c.b16 %v96, %v92
  %v109 = vpack.c.b16 %v97, %v93
  %v110 = vpack.c.b16 %v98, %v98
  %v111 = vpack.c.b16 %v99, %v99
  %v112 = vpack.c.b16 %v100, %v100
  %v113 = vpack.c.b16 %v101, %v101
  %vm122 = vcmask 293888
  %v124 = vsel %vm122, %v70, 0
  %v127 = vsel %vm122, %v71, 0
  %vm129 = vcmask 1041408
  %v131 = vsel %vm129, %v110, 0
  %v134 = vsel %vm129, %v111, 0
  %v137 = vsel %vm129, %v112, 0
  %v140 = vsel %vm129, %v113, 0
  %142 = vmatprep.subr.bf16.mxu0 %v103
  %143 = vmatpush1.bf16.msra.mxu0 %v102
  %144 = vmatprep.subr.bf16.mxu0 %v107
  %145 = vmatpush1.bf16.msra.mxu0 %v106
  %146 = vmatprep.subr.bf16.mxu0 %v134
  %147 = vmatpush1.bf16.msra.mxu0 %v131
  %148 = vmatprep.subr.bf16.mxu0 0
  %149 = vmatpush1.bf16.msra.mxu0 0
  %150 = vmatprep.subr.bf16.mxu0 0
  %151 = vmatpush1.bf16.msra.mxu0 0
  %152 = vmatprep.subr.bf16.mxu0 0
  %153 = vmatpush1.bf16.msra.mxu0 0
  %154 = vmatprep.subr.bf16.mxu0 0
  %155 = vmatpush1.bf16.msra.mxu0 0
  %156 = vmatprep.subr.bf16.mxu0 0
  %157 = vmatpush1.bf16.msra.mxu0 0
  %158 = vmatprep.subr.bf16.mxu0 0
  %159 = vmatpush1.bf16.msra.mxu0 0
  %160 = vmatprep.subr.bf16.mxu0 0
  %161 = vmatpush1.bf16.msra.mxu0 0
  %162 = vmatprep.subr.bf16.mxu0 0
  %163 = vmatpush1.bf16.msra.mxu0 0
  %164 = vmatprep.subr.bf16.mxu0 0
  %165 = vmatpush1.bf16.msra.mxu0 0
  %166 = vmatprep.subr.bf16.mxu0 0
  %167 = vmatpush1.bf16.msra.mxu0 0
  %168 = vmatprep.subr.bf16.mxu0 0
  %169 = vmatpush1.bf16.msra.mxu0 0
  %170 = vmatprep.subr.bf16.mxu0 0
  %171 = vmatpush1.bf16.msra.mxu0 0
  %172 = vmatprep.subr.bf16.mxu0 0
  %173 = vmatpush1.bf16.msra.mxu0 0
  %174 = vmatprep.mubr.bf16.mxu0 0
  %175 = vmatmul.mubr.bf16.gmra.mrb[0].mxu0 %v124
  %v176 = vpop.f32.mrb[0].mxu0
  %v177 = vadd.f32 %v45, %v176
  %v178 = vpop.f32.mrb[0].mxu0
  %v179 = vadd.f32 %v45, %v178
  %v180 = vpop.f32.mrb[0].mxu0
  %v181 = vadd.f32 %v50, %v180
  %v182 = vpop.f32.mrb[0].mxu0
  %v183 = vadd.f32 %v50, %v182
  %184 = vmatprep.mubr.bf16.mxu0 0
  %185 = vmatmul.mubr.bf16.gmra.mrb[0].mxu0 %v127
  %v186 = vpop.f32.mrb[0].mxu0
  %v187 = vadd.f32 %v55, %v186
  %v188 = vpop.f32.mrb[0].mxu0
  %v189 = vadd.f32 %v55, %v188
  %v190 = vpop.f32.mrb[0].mxu0
  %v191 = vadd.f32 %v60, %v190
  %v192 = vpop.f32.mrb[0].mxu0
  %v193 = vadd.f32 %v60, %v192
  %194 = vdwg.mxu0
  %195 = vmatprep.subr.bf16.mxu0 %v105
  %196 = vmatpush1.bf16.msra.mxu0 %v104
  %197 = vmatprep.subr.bf16.mxu0 %v109
  %198 = vmatpush1.bf16.msra.mxu0 %v108
  %199 = vmatprep.subr.bf16.mxu0 %v140
  %200 = vmatpush1.bf16.msra.mxu0 %v137
  %201 = vmatprep.subr.bf16.mxu0 0
  %202 = vmatpush1.bf16.msra.mxu0 0
  %203 = vmatprep.subr.bf16.mxu0 0
  %204 = vmatpush1.bf16.msra.mxu0 0
  %205 = vmatprep.subr.bf16.mxu0 0
  %206 = vmatpush1.bf16.msra.mxu0 0
  %207 = vmatprep.subr.bf16.mxu0 0
  %208 = vmatpush1.bf16.msra.mxu0 0
  %209 = vmatprep.subr.bf16.mxu0 0
  %210 = vmatpush1.bf16.msra.mxu0 0
  %211 = vmatprep.subr.bf16.mxu0 0
  %212 = vmatpush1.bf16.msra.mxu0 0
  %213 = vmatprep.subr.bf16.mxu0 0
  %214 = vmatpush1.bf16.msra.mxu0 0
  %215 = vmatprep.subr.bf16.mxu0 0
  %216 = vmatpush1.bf16.msra.mxu0 0
  %217 = vmatprep.subr.bf16.mxu0 0
  %218 = vmatpush1.bf16.msra.mxu0 0
  %219 = vmatprep.subr.bf16.mxu0 0
  %220 = vmatpush1.bf16.msra.mxu0 0
  %221 = vmatprep.subr.bf16.mxu0 0
  %222 = vmatpush1.bf16.msra.mxu0 0
  %223 = vmatprep.subr.bf16.mxu0 0
  %224 = vmatpush1.bf16.msra.mxu0 0
  %225 = vmatprep.subr.bf16.mxu0 0
  %226 = vmatpush1.bf16.msra.mxu0 0
  %227 = vmatprep.mubr.bf16.mxu0 0
  %228 = vmatmul.mubr.bf16.gmra.mrb[0].mxu0 %v124
  %v229 = vpop.f32.mrb[0].mxu0
  %v230 = vadd.f32 %v45, %v229
  %v231 = vpop.f32.mrb[0].mxu0
  %v232 = vadd.f32 %v45, %v231
  %v233 = vpop.f32.mrb[0].mxu0
  %v234 = vadd.f32 %v50, %v233
  %v235 = vpop.f32.mrb[0].mxu0
  %v236 = vadd.f32 %v50, %v235
  %237 = vmatprep.mubr.bf16.mxu0 0
  %238 = vmatmul.mubr.bf16.gmra.mrb[0].mxu0 %v127
  %v239 = vpop.f32.mrb[0].mxu0
  %v240 = vadd.f32 %v55, %v239
  %v241 = vpop.f32.mrb[0].mxu0
  %v242 = vadd.f32 %v55, %v241
  %v243 = vpop.f32.mrb[0].mxu0
  %v244 = vadd.f32 %v60, %v243
  %v245 = vpop.f32.mrb[0].mxu0
  %v246 = vadd.f32 %v60, %v245
  %247 = vdwg.mxu0
  %v248 = vmax.f32 %v177, 0.0
  %v249 = vmax.f32 %v179, 0.0
  %v250 = vmax.f32 %v230, 0.0
  %v251 = vmax.f32 %v232, 0.0
  %v252 = vmax.f32 %v181, 0.0
  %v253 = vmax.f32 %v183, 0.0
  %v254 = vmax.f32 %v234, 0.0
  %v255 = vmax.f32 %v236, 0.0
  %v256 = vmax.f32 %v187, 0.0
  %v257 = vmax.f32 %v189, 0.0
  %v258 = vmax.f32 %v240, 0.0
  %v259 = vmax.f32 %v242, 0.0
  %v260 = vmax.f32 %v191, 0.0
  %v261 = vmax.f32 %v193, 0.0
  %v262 = vmax.f32 %v244, 0.0
  %v263 = vmax.f32 %v246, 0.0
  %v264 = vld [vmem:[%s2] sm:$0xff]
  %v265 = vld [vmem:[%s2 + $0x8] sm:$0xff]
  %v266 = vld [vmem:[%s2 + $0x10] sm:$0xff]
  %v267 = vld [vmem:[%s2 + $0x18] sm:$0xff]
  %v268 = vld [vmem:[%s2 + $0x20] sm:$0xff]
  %v269 = vld [vmem:[%s2 + $0x28] sm:$0xff]
  %v270 = vld [vmem:[%s2 + $0x30] sm:$0xff]
  %v271 = vld [vmem:[%s2 + $0x38] sm:$0xff]
  %v272 = vld [vmem:[%s2 + $0x40] sm:$0xff]
  %v273 = vld [vmem:[%s2 + $0x48] sm:$0xff]
  %v274 = vld [vmem:[%s2 + $0x50] sm:$0xff]
  %v275 = vld [vmem:[%s2 + $0x58] sm:$0xff]
  %v276 = vld [vmem:[%s2 + $0x60] sm:$0xff]
  %v277 = vld [vmem:[%s2 + $0x68] sm:$0xff]
  %v278 = vld [vmem:[%s2 + $0x70] sm:$0xff]
  %v279 = vld [vmem:[%s2 + $0x78] sm:$0xff]
  %v280 = vld [vmem:[%s2 + $0x80] sm:$0xff]
  %v281 = vld [vmem:[%s2 + $0x88] sm:$0xff]
  %v282 = vld [vmem:[%s2 + $0x90] sm:$0xff]
  %v283 = vld [vmem:[%s2 + $0x98] sm:$0xff]
  %v284 = vld [vmem:[%s2 + $0xa0] sm:$0xff]
  %v285 = vld [vmem:[%s2 + $0xa8] sm:$0xff]
  %v286 = vld [vmem:[%s2 + $0xb0] sm:$0xff]
  %v287 = vld [vmem:[%s2 + $0xb8] sm:$0xff]
  %v288 = vld [vmem:[%s2 + $0xc0] sm:$0xff]
  %v289 = vld [vmem:[%s2 + $0xc8] sm:$0xff]
  %v290 = vld [vmem:[%s2 + $0xd0] sm:$0xff]
  %v291 = vld [vmem:[%s2 + $0xd8] sm:$0xff]
  %v292 = vld [vmem:[%s2 + $0xe0] sm:$0xff]
  %v293 = vld [vmem:[%s2 + $0xe8] sm:$0xff]
  %v294 = vld [vmem:[%s2 + $0xf0] sm:$0xff]
  %v295 = vld [vmem:[%s2 + $0xf8] sm:$0xff]
  %v296 = vld [vmem:[%s2 + $0x100] sm:$0xff]
  %v297 = vld [vmem:[%s2 + $0x108] sm:$0xff]
  %v298 = vld [vmem:[%s2 + $0x110] sm:$0xff]
  %v299 = vld [vmem:[%s2 + $0x118] sm:$0xff]
  %v300 = vld [vmem:[%s2 + $0x120] sm:$0xff]
  %v301 = vld [vmem:[%s2 + $0x128] sm:$0xff]
  %v302 = vld [vmem:[%s2 + $0x130] sm:$0xff]
  %v303 = vld [vmem:[%s2 + $0x138] sm:$0xff]
  %v304 = vld [vmem:[%s2 + $0x140] sm:$0xff]
  %v305 = vld [vmem:[%s2 + $0x148] sm:$0xff]
  %v306 = vld [vmem:[%s2 + $0x150] sm:$0xff]
  %v307 = vld [vmem:[%s2 + $0x158] sm:$0xff]
  %v308 = vld [vmem:[%s2 + $0x160] sm:$0xff]
  %v309 = vld [vmem:[%s2 + $0x168] sm:$0xff]
  %v310 = vld [vmem:[%s2 + $0x170] sm:$0xff]
  %v311 = vld [vmem:[%s2 + $0x178] sm:$0xff]
  %v312 = vld [vmem:[%s2 + $0x180] sm:$0xff]
  %v313 = vld [vmem:[%s2 + $0x188] sm:$0xff]
  %v314 = vld [vmem:[%s2 + $0x190] sm:$0xff]
  %v315 = vld [vmem:[%s2 + $0x198] sm:$0xff]
  %v316 = vld [vmem:[%s2 + $0x1a0] sm:$0xff]
  %v317 = vld [vmem:[%s2 + $0x1a8] sm:$0xff]
  %v318 = vld [vmem:[%s2 + $0x1b0] sm:$0xff]
  %v319 = vld [vmem:[%s2 + $0x1b8] sm:$0xff]
  %v320 = vld [vmem:[%s2 + $0x1c0] sm:$0xff]
  %v321 = vld [vmem:[%s2 + $0x1c8] sm:$0xff]
  %v322 = vld [vmem:[%s2 + $0x1d0] sm:$0xff]
  %v323 = vld [vmem:[%s2 + $0x1d8] sm:$0xff]
  %v324 = vld [vmem:[%s2 + $0x1e0] sm:$0xff]
  %v325 = vld [vmem:[%s2 + $0x1e8] sm:$0xff]
  %v326 = vld [vmem:[%s2 + $0x1f0] sm:$0xff]
  %v327 = vld [vmem:[%s2 + $0x1f8] sm:$0xff]
  %328 = vmatprep.subr.mxu0 0.0
  %329 = vmatpush1.msra.mxu0 %v264
  %330 = vmatprep.subr.mxu0 0.0
  %331 = vmatpush1.msra.mxu0 %v265
  %332 = vmatprep.subr.mxu0 0.0
  %333 = vmatpush1.msra.mxu0 %v266
  %334 = vmatprep.subr.mxu0 0.0
  %335 = vmatpush1.msra.mxu0 %v267
  %336 = vmatprep.subr.mxu0 0.0
  %337 = vmatpush1.msra.mxu0 %v268
  %338 = vmatprep.subr.mxu0 0.0
  %339 = vmatpush1.msra.mxu0 %v269
  %340 = vmatprep.subr.mxu0 0.0
  %341 = vmatpush1.msra.mxu0 %v270
  %342 = vmatprep.subr.mxu0 0.0
  %343 = vmatpush1.msra.mxu0 %v271
  %344 = vmatprep.subr.mxu0 0.0
  %345 = vmatpush1.msra.mxu0 %v272
  %346 = vmatprep.subr.mxu0 0.0
  %347 = vmatpush1.msra.mxu0 %v273
  %348 = vmatprep.subr.mxu0 0.0
  %349 = vmatpush1.msra.mxu0 %v274
  %350 = vmatprep.subr.mxu0 0.0
  %351 = vmatpush1.msra.mxu0 %v275
  %352 = vmatprep.subr.mxu0 0.0
  %353 = vmatpush1.msra.mxu0 %v276
  %354 = vmatprep.subr.mxu0 0.0
  %355 = vmatpush1.msra.mxu0 %v277
  %356 = vmatprep.subr.mxu0 0.0
  %357 = vmatpush1.msra.mxu0 %v278
  %358 = vmatprep.subr.mxu0 0.0
  %359 = vmatpush1.msra.mxu0 %v279
  %360 = vmatprep.subr.mxu0 0.0
  %361 = vmatpush1.msra.mxu0 %v280
  %362 = vmatprep.subr.mxu0 0.0
  %363 = vmatpush1.msra.mxu0 %v281
  %364 = vmatprep.subr.mxu0 0.0
  %365 = vmatpush1.msra.mxu0 %v282
  %366 = vmatprep.subr.mxu0 0.0
  %367 = vmatpush1.msra.mxu0 %v283
  %368 = vmatprep.subr.mxu0 0.0
  %369 = vmatpush1.msra.mxu0 %v284
  %370 = vmatprep.subr.mxu0 0.0
  %371 = vmatpush1.msra.mxu0 %v285
  %372 = vmatprep.subr.mxu0 0.0
  %373 = vmatpush1.msra.mxu0 %v286
  %374 = vmatprep.subr.mxu0 0.0
  %375 = vmatpush1.msra.mxu0 %v287
  %376 = vmatprep.subr.mxu0 0.0
  %377 = vmatpush1.msra.mxu0 %v288
  %378 = vmatprep.subr.mxu0 0.0
  %379 = vmatpush1.msra.mxu0 %v289
  %380 = vmatprep.subr.mxu0 0.0
  %381 = vmatpush1.msra.mxu0 %v290
  %382 = vmatprep.subr.mxu0 0.0
  %383 = vmatpush1.msra.mxu0 %v291
  %384 = vmatprep.subr.mxu0 0.0
  %385 = vmatpush1.msra.mxu0 %v292
  %386 = vmatprep.subr.mxu0 0.0
  %387 = vmatpush1.msra.mxu0 %v293
  %388 = vmatprep.subr.mxu0 0.0
  %389 = vmatpush1.msra.mxu0 %v294
  %390 = vmatprep.subr.mxu0 0.0
  %391 = vmatpush1.msra.mxu0 %v295
  %392 = vmatprep.mubr.f32.mxu0 %v249
  %393 = vmatmul.mubr.f32.gmra.mrb[0].mxu0 %v248
  %v394 = vpop.f32.mrb[0].mxu0
  %v395 = vadd.f32 0.0, %v394
  %v396 = vpop.f32.mrb[0].mxu0
  %397 = vmatprep.mubr.f32.mxu0 %v253
  %398 = vmatmul.mubr.f32.gmra.mrb[0].mxu0 %v252
  %v399 = vpop.f32.mrb[0].mxu0
  %v400 = vadd.f32 0.0, %v399
  %v401 = vpop.f32.mrb[0].mxu0
  %402 = vmatprep.mubr.f32.mxu0 %v257
  %403 = vmatmul.mubr.f32.gmra.mrb[0].mxu0 %v256
  %v404 = vpop.f32.mrb[0].mxu0
  %v405 = vadd.f32 0.0, %v404
  %v406 = vpop.f32.mrb[0].mxu0
  %407 = vmatprep.mubr.f32.mxu0 %v261
  %408 = vmatmul.mubr.f32.gmra.mrb[0].mxu0 %v260
  %v409 = vpop.f32.mrb[0].mxu0
  %v410 = vadd.f32 0.0, %v409
  %v411 = vpop.f32.mrb[0].mxu0
  %412 = vdwg.mxu0
  %413 = vmatprep.subr.mxu0 0.0
  %414 = vmatpush1.msra.mxu0 %v296
  %415 = vmatprep.subr.mxu0 0.0
  %416 = vmatpush1.msra.mxu0 %v297
  %417 = vmatprep.subr.mxu0 0.0
  %418 = vmatpush1.msra.mxu0 %v298
  %419 = vmatprep.subr.mxu0 0.0
  %420 = vmatpush1.msra.mxu0 %v299
  %421 = vmatprep.subr.mxu0 0.0
  %422 = vmatpush1.msra.mxu0 %v300
  %423 = vmatprep.subr.mxu0 0.0
  %424 = vmatpush1.msra.mxu0 %v301
  %425 = vmatprep.subr.mxu0 0.0
  %426 = vmatpush1.msra.mxu0 %v302
  %427 = vmatprep.subr.mxu0 0.0
  %428 = vmatpush1.msra.mxu0 %v303
  %429 = vmatprep.subr.mxu0 0.0
  %430 = vmatpush1.msra.mxu0 %v304
  %431 = vmatprep.subr.mxu0 0.0
  %432 = vmatpush1.msra.mxu0 %v305
  %433 = vmatprep.subr.mxu0 0.0
  %434 = vmatpush1.msra.mxu0 %v306
  %435 = vmatprep.subr.mxu0 0.0
  %436 = vmatpush1.msra.mxu0 %v307
  %437 = vmatprep.subr.mxu0 0.0
  %438 = vmatpush1.msra.mxu0 %v308
  %439 = vmatprep.subr.mxu0 0.0
  %440 = vmatpush1.msra.mxu0 %v309
  %441 = vmatprep.subr.mxu0 0.0
  %442 = vmatpush1.msra.mxu0 %v310
  %443 = vmatprep.subr.mxu0 0.0
  %444 = vmatpush1.msra.mxu0 %v311
  %445 = vmatprep.subr.mxu0 0.0
  %446 = vmatpush1.msra.mxu0 %v312
  %447 = vmatprep.subr.mxu0 0.0
  %448 = vmatpush1.msra.mxu0 %v313
  %449 = vmatprep.subr.mxu0 0.0
  %450 = vmatpush1.msra.mxu0 %v314
  %451 = vmatprep.subr.mxu0 0.0
  %452 = vmatpush1.msra.mxu0 %v315
  %453 = vmatprep.subr.mxu0 0.0
  %454 = vmatpush1.msra.mxu0 %v316
  %455 = vmatprep.subr.mxu0 0.0
  %456 = vmatpush1.msra.mxu0 %v317
  %457 = vmatprep.subr.mxu0 0.0
  %458 = vmatpush1.msra.mxu0 %v318
  %459 = vmatprep.subr.mxu0 0.0
  %460 = vmatpush1.msra.mxu0 %v319
  %461 = vmatprep.subr.mxu0 0.0
  %462 = vmatpush1.msra.mxu0 %v320
  %463 = vmatprep.subr.mxu0 0.0
  %464 = vmatpush1.msra.mxu0 %v321
  %465 = vmatprep.subr.mxu0 0.0
  %466 = vmatpush1.msra.mxu0 %v322
  %467 = vmatprep.subr.mxu0 0.0
  %468 = vmatpush1.msra.mxu0 %v323
  %469 = vmatprep.subr.mxu0 0.0
  %470 = vmatpush1.msra.mxu0 %v324
  %471 = vmatprep.subr.mxu0 0.0
  %472 = vmatpush1.msra.mxu0 %v325
  %473 = vmatprep.subr.mxu0 0.0
  %474 = vmatpush1.msra.mxu0 %v326
  %475 = vmatprep.subr.mxu0 0.0
  %476 = vmatpush1.msra.mxu0 %v327
  %477 = vmatprep.mubr.f32.mxu0 %v251
  %478 = vmatmul.mubr.f32.gmra.mrb[0].mxu0 %v250
  %v479 = vpop.f32.mrb[0].mxu0
  %v480 = vadd.f32 %v395, %v479
  %v481 = vpop.f32.mrb[0].mxu0
  %482 = vmatprep.mubr.f32.mxu0 %v255
  %483 = vmatmul.mubr.f32.gmra.mrb[0].mxu0 %v254
  %v484 = vpop.f32.mrb[0].mxu0
  %v485 = vadd.f32 %v400, %v484
  %v486 = vpop.f32.mrb[0].mxu0
  %487 = vmatprep.mubr.f32.mxu0 %v259
  %488 = vmatmul.mubr.f32.gmra.mrb[0].mxu0 %v258
  %v489 = vpop.f32.mrb[0].mxu0
  %v490 = vadd.f32 %v405, %v489
  %v491 = vpop.f32.mrb[0].mxu0
  %492 = vmatprep.mubr.f32.mxu0 %v263
  %493 = vmatmul.mubr.f32.gmra.mrb[0].mxu0 %v262
  %v494 = vpop.f32.mrb[0].mxu0
  %v495 = vadd.f32 %v410, %v494
  %v496 = vpop.f32.mrb[0].mxu0
  %497 = vdwg.mxu0
  %v498 = vmax.f32 %v248, %v249
  %499 = vmax.xlane.f32.xlu0 %v498
  %v500 = vpop.xlane.xlu0 %499
  %v501 = vmax.f32 %v252, %v253
  %502 = vmax.xlane.f32.xlu0 %v501
  %v503 = vpop.xlane.xlu0 %502
  %v504 = vmax.f32 %v256, %v257
  %505 = vmax.xlane.f32.xlu0 %v504
  %v506 = vpop.xlane.xlu0 %505
  %v507 = vmax.f32 %v260, %v261
  %508 = vmax.xlane.f32.xlu0 %v507
  %v509 = vpop.xlane.xlu0 %508
  %v510 = vmax.f32 %v250, %v251
  %511 = vmax.xlane.f32.xlu0 %v510
  %v512 = vpop.xlane.xlu0 %511
  %v513 = vmax.f32 %v254, %v255
  %514 = vmax.xlane.f32.xlu0 %v513
  %v515 = vpop.xlane.xlu0 %514
  %v516 = vmax.f32 %v258, %v259
  %517 = vmax.xlane.f32.xlu0 %v516
  %v518 = vpop.xlane.xlu0 %517
  %v519 = vmax.f32 %v262, %v263
  %520 = vmax.xlane.f32.xlu0 %v519
  %v521 = vpop.xlane.xlu0 %520
  %vm522 = vcmask 7168
  %v523 = vsel %vm522, %v500, %v512
  %v524 = vsel %vm522, %v503, %v515
  %v525 = vsel %vm522, %v506, %v518
  %v526 = vsel %vm522, %v509, %v521
  %v527 = vld [vmem:[%s4] sm:$0xff]
  %v528 = vld [vmem:[%s4 + $0x8] sm:$0xff]
  %v529 = vld [vmem:[%s4 + $0x10] sm:$0xff]
  %v530 = vld [vmem:[%s4 + $0x18] sm:$0xff]
  %v531 = vld [vmem:[%s4 + $0x20] sm:$0xff]
  %533 = vset.pattern.permute.xlu0 64
  %534 = vperm.xlu0 %533, %v527
  %v535 = vpop.permute.xlu0 %534
  %vm537 = vcmask 523264
  %v538 = vsel %vm537, %v527, 0
  %540 = vmatprep.subr.mxu0 0.0
  %541 = vmatpush1.msra.mxu0 %v480
  %542 = vmatprep.subr.mxu0 0.0
  %543 = vmatpush1.msra.mxu0 %v485
  %544 = vmatprep.subr.mxu0 0.0
  %545 = vmatpush1.msra.mxu0 %v490
  %546 = vmatprep.subr.mxu0 0.0
  %547 = vmatpush1.msra.mxu0 %v495
  %548 = vmatprep.subr.mxu0 0.0
  %549 = vmatpush1.msra.mxu0 %v523
  %550 = vmatprep.subr.mxu0 0.0
  %551 = vmatpush1.msra.mxu0 %v524
  %552 = vmatprep.subr.mxu0 0.0
  %553 = vmatpush1.msra.mxu0 %v525
  %554 = vmatprep.subr.mxu0 0.0
  %555 = vmatpush1.msra.mxu0 %v526
  %556 = vmatprep.subr.mxu0 0.0
  %557 = vmatpush1.msra.mxu0 0.0
  %558 = vmatprep.subr.mxu0 0.0
  %559 = vmatpush1.msra.mxu0 0.0
  %560 = vmatprep.subr.mxu0 0.0
  %561 = vmatpush1.msra.mxu0 0.0
  %562 = vmatprep.subr.mxu0 0.0
  %563 = vmatpush1.msra.mxu0 0.0
  %564 = vmatprep.subr.mxu0 0.0
  %565 = vmatpush1.msra.mxu0 0.0
  %566 = vmatprep.subr.mxu0 0.0
  %567 = vmatpush1.msra.mxu0 0.0
  %568 = vmatprep.subr.mxu0 0.0
  %569 = vmatpush1.msra.mxu0 0.0
  %570 = vmatprep.subr.mxu0 0.0
  %571 = vmatpush1.msra.mxu0 0.0
  %572 = vmatprep.subr.mxu0 0.0
  %573 = vmatpush1.msra.mxu0 0.0
  %574 = vmatprep.subr.mxu0 0.0
  %575 = vmatpush1.msra.mxu0 0.0
  %576 = vmatprep.subr.mxu0 0.0
  %577 = vmatpush1.msra.mxu0 0.0
  %578 = vmatprep.subr.mxu0 0.0
  %579 = vmatpush1.msra.mxu0 0.0
  %580 = vmatprep.subr.mxu0 0.0
  %581 = vmatpush1.msra.mxu0 0.0
  %582 = vmatprep.subr.mxu0 0.0
  %583 = vmatpush1.msra.mxu0 0.0
  %584 = vmatprep.subr.mxu0 0.0
  %585 = vmatpush1.msra.mxu0 0.0
  %586 = vmatprep.subr.mxu0 0.0
  %587 = vmatpush1.msra.mxu0 0.0
  %588 = vmatprep.subr.mxu0 0.0
  %589 = vmatpush1.msra.mxu0 0.0
  %590 = vmatprep.subr.mxu0 0.0
  %591 = vmatpush1.msra.mxu0 0.0
  %592 = vmatprep.subr.mxu0 0.0
  %593 = vmatpush1.msra.mxu0 0.0
  %594 = vmatprep.subr.mxu0 0.0
  %595 = vmatpush1.msra.mxu0 0.0
  %596 = vmatprep.subr.mxu0 0.0
  %597 = vmatpush1.msra.mxu0 0.0
  %598 = vmatprep.subr.mxu0 0.0
  %599 = vmatpush1.msra.mxu0 0.0
  %600 = vmatprep.subr.mxu0 0.0
  %601 = vmatpush1.msra.mxu0 0.0
  %602 = vmatprep.subr.mxu0 0.0
  %603 = vmatpush1.msra.mxu0 0.0
  %604 = vmatprep.mubr.f32.mxu0 0.0
  %605 = vmatmul.mubr.f32.gmra.mrb[0].mxu0 %v538
  %v606 = vpop.f32.mrb[0].mxu0
  %v607 = vadd.f32 %v535, %v606
  %v608 = vpop.f32.mrb[0].mxu0
  %609 = vdwg.mxu0
  %v610 = vmax.f32 %v607, 0.0
  %612 = vset.pattern.permute.xlu0 8
  %613 = vperm.xlu0 %612, %v528
  %v614 = vpop.permute.xlu0 %613
  %617 = vset.pattern.permute.xlu0 8
  %618 = vperm.xlu0 %617, %v529
  %v619 = vpop.permute.xlu0 %618
  %622 = vset.pattern.permute.xlu0 8
  %623 = vperm.xlu0 %622, %v530
  %v624 = vpop.permute.xlu0 %623
  %627 = vset.pattern.permute.xlu0 8
  %628 = vperm.xlu0 %627, %v531
  %v629 = vpop.permute.xlu0 %628
  %vm631 = vcmask 64512
  %v632 = vsel %vm631, %v528, 0
  %v634 = vsel %vm631, %v529, 0
  %v636 = vsel %vm631, %v530, 0
  %v638 = vsel %vm631, %v531, 0
  %640 = vmatprep.subr.mxu0 0.0
  %641 = vmatpush1.msra.mxu0 %v610
  %642 = vmatprep.subr.mxu0 0.0
  %643 = vmatpush1.msra.mxu0 0.0
  %644 = vmatprep.subr.mxu0 0.0
  %645 = vmatpush1.msra.mxu0 0.0
  %646 = vmatprep.subr.mxu0 0.0
  %647 = vmatpush1.msra.mxu0 0.0
  %648 = vmatprep.subr.mxu0 0.0
  %649 = vmatpush1.msra.mxu0 0.0
  %650 = vmatprep.subr.mxu0 0.0
  %651 = vmatpush1.msra.mxu0 0.0
  %652 = vmatprep.subr.mxu0 0.0
  %653 = vmatpush1.msra.mxu0 0.0
  %654 = vmatprep.subr.mxu0 0.0
  %655 = vmatpush1.msra.mxu0 0.0
  %656 = vmatprep.subr.mxu0 0.0
  %657 = vmatpush1.msra.mxu0 0.0
  %658 = vmatprep.subr.mxu0 0.0
  %659 = vmatpush1.msra.mxu0 0.0
  %660 = vmatprep.subr.mxu0 0.0
  %661 = vmatpush1.msra.mxu0 0.0
  %662 = vmatprep.subr.mxu0 0.0
  %663 = vmatpush1.msra.mxu0 0.0
  %664 = vmatprep.subr.mxu0 0.0
  %665 = vmatpush1.msra.mxu0 0.0
  %666 = vmatprep.subr.mxu0 0.0
  %667 = vmatpush1.msra.mxu0 0.0
  %668 = vmatprep.subr.mxu0 0.0
  %669 = vmatpush1.msra.mxu0 0.0
  %670 = vmatprep.subr.mxu0 0.0
  %671 = vmatpush1.msra.mxu0 0.0
  %672 = vmatprep.subr.mxu0 0.0
  %673 = vmatpush1.msra.mxu0 0.0
  %674 = vmatprep.subr.mxu0 0.0
  %675 = vmatpush1.msra.mxu0 0.0
  %676 = vmatprep.subr.mxu0 0.0
  %677 = vmatpush1.msra.mxu0 0.0
  %678 = vmatprep.subr.mxu0 0.0
  %679 = vmatpush1.msra.mxu0 0.0
  %680 = vmatprep.subr.mxu0 0.0
  %681 = vmatpush1.msra.mxu0 0.0
  %682 = vmatprep.subr.mxu0 0.0
  %683 = vmatpush1.msra.mxu0 0.0
  %684 = vmatprep.subr.mxu0 0.0
  %685 = vmatpush1.msra.mxu0 0.0
  %686 = vmatprep.subr.mxu0 0.0
  %687 = vmatpush1.msra.mxu0 0.0
  %688 = vmatprep.subr.mxu0 0.0
  %689 = vmatpush1.msra.mxu0 0.0
  %690 = vmatprep.subr.mxu0 0.0
  %691 = vmatpush1.msra.mxu0 0.0
  %692 = vmatprep.subr.mxu0 0.0
  %693 = vmatpush1.msra.mxu0 0.0
  %694 = vmatprep.subr.mxu0 0.0
  %695 = vmatpush1.msra.mxu0 0.0
  %696 = vmatprep.subr.mxu0 0.0
  %697 = vmatpush1.msra.mxu0 0.0
  %698 = vmatprep.subr.mxu0 0.0
  %699 = vmatpush1.msra.mxu0 0.0
  %700 = vmatprep.subr.mxu0 0.0
  %701 = vmatpush1.msra.mxu0 0.0
  %702 = vmatprep.subr.mxu0 0.0
  %703 = vmatpush1.msra.mxu0 0.0
  %704 = vmatprep.mubr.f32.mxu0 0.0
  %705 = vmatmul.mubr.f32.gmra.mrb[0].mxu0 %v632
  %v706 = vpop.f32.mrb[0].mxu0
  %v707 = vadd.f32 %v614, %v706
  %v708 = vpop.f32.mrb[0].mxu0
  %709 = vmatprep.mubr.f32.mxu0 0.0
  %710 = vmatmul.mubr.f32.gmra.mrb[0].mxu0 %v634
  %v711 = vpop.f32.mrb[0].mxu0
  %v712 = vadd.f32 %v619, %v711
  %v713 = vpop.f32.mrb[0].mxu0
  %714 = vmatprep.mubr.f32.mxu0 0.0
  %715 = vmatmul.mubr.f32.gmra.mrb[0].mxu0 %v636
  %v716 = vpop.f32.mrb[0].mxu0
  %v717 = vadd.f32 %v624, %v716
  %v718 = vpop.f32.mrb[0].mxu0
  %719 = vmatprep.mubr.f32.mxu0 0.0
  %720 = vmatmul.mubr.f32.gmra.mrb[0].mxu0 %v638
  %v721 = vpop.f32.mrb[0].mxu0
  %v722 = vadd.f32 %v629, %v721
  %v723 = vpop.f32.mrb[0].mxu0
  %724 = vdwg.mxu0
  %v725 = vxor.u32 %v707, 2147483648
  %v726 = vxor.u32 %v712, 2147483648
  %v727 = vxor.u32 %v717, 2147483648
  %v728 = vxor.u32 %v722, 2147483648
  %v729 = vmul.f32 %v725, 1.442695
  %v730 = vpow.pop %v729
  %v731 = vmul.f32 %v726, 1.442695
  %v732 = vpow.pop %v731
  %v733 = vmul.f32 %v727, 1.442695
  %v734 = vpow.pop %v733
  %v735 = vmul.f32 %v728, 1.442695
  %v736 = vpow.pop %v735
  %v737 = vadd.f32 %v730, 1.0
  %v738 = vadd.f32 %v732, 1.0
  %v739 = vadd.f32 %v734, 1.0
  %v740 = vadd.f32 %v736, 1.0
  %v741 = vrcp.pop %v737
  %v742 = vmul.f32 1.0, %v741
  %v743 = vrcp.pop %v738
  %v744 = vmul.f32 1.0, %v743
  %v745 = vrcp.pop %v739
  %v746 = vmul.f32 1.0, %v745
  %v747 = vrcp.pop %v740
  %v748 = vmul.f32 1.0, %v747
  %v749 = vld [vmem:[%s3] sm:$0xff]
  %v751 = vcombine.high %v749, %v749
  %v753 = vunpack.c.l.s4 1983009808
  %v754 = vunpack.c.0.s8 %v753
  %v755 = vlaneseq
  %v756 = vshrl.u32 %v755, 7
  %v757 = vsub.s32 %v754, %v756
  %v758 = vrot.slane %v749, %v757
  %v760 = vunpack.c.l.s4 1983009808
  %v761 = vunpack.c.0.s8 %v760
  %v762 = vlaneseq
  %v763 = vshrl.u32 %v762, 7
  %v764 = vsub.s32 %v761, %v763
  %v765 = vrot.slane %v751, %v764
  %v766 = vcombine.high %v758, %v758
  %v767 = vcombine.high %v765, %v765
  %vm768 = vcmask 15360
  %v770 = vsel %vm768, %v742, 0
  %v773 = vsel %vm768, %v744, 0
  %v776 = vsel %vm768, %v746, 0
  %v779 = vsel %vm768, %v748, 0
  %v781 = vsel %vm129, %v758, 0
  %v783 = vsel %vm129, %v766, 0
  %v785 = vsel %vm129, %v765, 0
  %v787 = vsel %vm129, %v767, 0
  %789 = vmatprep.subr.mxu0 %v783
  %790 = vmatpush1.msra.mxu0 %v781
  %791 = vmatprep.subr.mxu0 0.0
  %792 = vmatpush1.msra.mxu0 0.0
  %793 = vmatprep.subr.mxu0 0.0
  %794 = vmatpush1.msra.mxu0 0.0
  %795 = vmatprep.subr.mxu0 0.0
  %796 = vmatpush1.msra.mxu0 0.0
  %797 = vmatprep.subr.mxu0 0.0
  %798 = vmatpush1.msra.mxu0 0.0
  %799 = vmatprep.subr.mxu0 0.0
  %800 = vmatpush1.msra.mxu0 0.0
  %801 = vmatprep.subr.mxu0 0.0
  %802 = vmatpush1.msra.mxu0 0.0
  %803 = vmatprep.subr.mxu0 0.0
  %804 = vmatpush1.msra.mxu0 0.0
  %805 = vmatprep.subr.mxu0 0.0
  %806 = vmatpush1.msra.mxu0 0.0
  %807 = vmatprep.subr.mxu0 0.0
  %808 = vmatpush1.msra.mxu0 0.0
  %809 = vmatprep.subr.mxu0 0.0
  %810 = vmatpush1.msra.mxu0 0.0
  %811 = vmatprep.subr.mxu0 0.0
  %812 = vmatpush1.msra.mxu0 0.0
  %813 = vmatprep.subr.mxu0 0.0
  %814 = vmatpush1.msra.mxu0 0.0
  %815 = vmatprep.subr.mxu0 0.0
  %816 = vmatpush1.msra.mxu0 0.0
  %817 = vmatprep.subr.mxu0 0.0
  %818 = vmatpush1.msra.mxu0 0.0
  %819 = vmatprep.subr.mxu0 0.0
  %820 = vmatpush1.msra.mxu0 0.0
  %821 = vmatprep.subr.mxu0 0.0
  %822 = vmatpush1.msra.mxu0 0.0
  %823 = vmatprep.subr.mxu0 0.0
  %824 = vmatpush1.msra.mxu0 0.0
  %825 = vmatprep.subr.mxu0 0.0
  %826 = vmatpush1.msra.mxu0 0.0
  %827 = vmatprep.subr.mxu0 0.0
  %828 = vmatpush1.msra.mxu0 0.0
  %829 = vmatprep.subr.mxu0 0.0
  %830 = vmatpush1.msra.mxu0 0.0
  %831 = vmatprep.subr.mxu0 0.0
  %832 = vmatpush1.msra.mxu0 0.0
  %833 = vmatprep.subr.mxu0 0.0
  %834 = vmatpush1.msra.mxu0 0.0
  %835 = vmatprep.subr.mxu0 0.0
  %836 = vmatpush1.msra.mxu0 0.0
  %837 = vmatprep.subr.mxu0 0.0
  %838 = vmatpush1.msra.mxu0 0.0
  %839 = vmatprep.subr.mxu0 0.0
  %840 = vmatpush1.msra.mxu0 0.0
  %841 = vmatprep.subr.mxu0 0.0
  %842 = vmatpush1.msra.mxu0 0.0
  %843 = vmatprep.subr.mxu0 0.0
  %844 = vmatpush1.msra.mxu0 0.0
  %845 = vmatprep.subr.mxu0 0.0
  %846 = vmatpush1.msra.mxu0 0.0
  %847 = vmatprep.subr.mxu0 0.0
  %848 = vmatpush1.msra.mxu0 0.0
  %849 = vmatprep.subr.mxu0 0.0
  %850 = vmatpush1.msra.mxu0 0.0
  %851 = vmatprep.subr.mxu0 0.0
  %852 = vmatpush1.msra.mxu0 0.0
  %853 = vmatprep.mubr.f32.mxu0 0.0
  %854 = vmatmul.mubr.f32.gmra.mrb[0].mxu0 %v770
  %v855 = vpop.f32.mrb[0].mxu0
  %v856 = vadd.f32 0.0, %v855
  %v857 = vpop.f32.mrb[0].mxu0
  %v858 = vadd.f32 0.0, %v857
  %859 = vmatprep.mubr.f32.mxu0 0.0
  %860 = vmatmul.mubr.f32.gmra.mrb[0].mxu0 %v773
  %v861 = vpop.f32.mrb[0].mxu0
  %v862 = vadd.f32 0.0, %v861
  %v863 = vpop.f32.mrb[0].mxu0
  %v864 = vadd.f32 0.0, %v863
  %865 = vmatprep.mubr.f32.mxu0 0.0
  %866 = vmatmul.mubr.f32.gmra.mrb[0].mxu0 %v776
  %v867 = vpop.f32.mrb[0].mxu0
  %v868 = vadd.f32 0.0, %v867
  %v869 = vpop.f32.mrb[0].mxu0
  %v870 = vadd.f32 0.0, %v869
  %871 = vmatprep.mubr.f32.mxu0 0.0
  %872 = vmatmul.mubr.f32.gmra.mrb[0].mxu0 %v779
  %v873 = vpop.f32.mrb[0].mxu0
  %v874 = vadd.f32 0.0, %v873
  %v875 = vpop.f32.mrb[0].mxu0
  %v876 = vadd.f32 0.0, %v875
  %877 = vdwg.mxu0
  %878 = vmatprep.subr.mxu0 %v787
  %879 = vmatpush1.msra.mxu0 %v785
  %880 = vmatprep.subr.mxu0 0.0
  %881 = vmatpush1.msra.mxu0 0.0
  %882 = vmatprep.subr.mxu0 0.0
  %883 = vmatpush1.msra.mxu0 0.0
  %884 = vmatprep.subr.mxu0 0.0
  %885 = vmatpush1.msra.mxu0 0.0
  %886 = vmatprep.subr.mxu0 0.0
  %887 = vmatpush1.msra.mxu0 0.0
  %888 = vmatprep.subr.mxu0 0.0
  %889 = vmatpush1.msra.mxu0 0.0
  %890 = vmatprep.subr.mxu0 0.0
  %891 = vmatpush1.msra.mxu0 0.0
  %892 = vmatprep.subr.mxu0 0.0
  %893 = vmatpush1.msra.mxu0 0.0
  %894 = vmatprep.subr.mxu0 0.0
  %895 = vmatpush1.msra.mxu0 0.0
  %896 = vmatprep.subr.mxu0 0.0
  %897 = vmatpush1.msra.mxu0 0.0
  %898 = vmatprep.subr.mxu0 0.0
  %899 = vmatpush1.msra.mxu0 0.0
  %900 = vmatprep.subr.mxu0 0.0
  %901 = vmatpush1.msra.mxu0 0.0
  %902 = vmatprep.subr.mxu0 0.0
  %903 = vmatpush1.msra.mxu0 0.0
  %904 = vmatprep.subr.mxu0 0.0
  %905 = vmatpush1.msra.mxu0 0.0
  %906 = vmatprep.subr.mxu0 0.0
  %907 = vmatpush1.msra.mxu0 0.0
  %908 = vmatprep.subr.mxu0 0.0
  %909 = vmatpush1.msra.mxu0 0.0
  %910 = vmatprep.subr.mxu0 0.0
  %911 = vmatpush1.msra.mxu0 0.0
  %912 = vmatprep.subr.mxu0 0.0
  %913 = vmatpush1.msra.mxu0 0.0
  %914 = vmatprep.subr.mxu0 0.0
  %915 = vmatpush1.msra.mxu0 0.0
  %916 = vmatprep.subr.mxu0 0.0
  %917 = vmatpush1.msra.mxu0 0.0
  %918 = vmatprep.subr.mxu0 0.0
  %919 = vmatpush1.msra.mxu0 0.0
  %920 = vmatprep.subr.mxu0 0.0
  %921 = vmatpush1.msra.mxu0 0.0
  %922 = vmatprep.subr.mxu0 0.0
  %923 = vmatpush1.msra.mxu0 0.0
  %924 = vmatprep.subr.mxu0 0.0
  %925 = vmatpush1.msra.mxu0 0.0
  %926 = vmatprep.subr.mxu0 0.0
  %927 = vmatpush1.msra.mxu0 0.0
  %928 = vmatprep.subr.mxu0 0.0
  %929 = vmatpush1.msra.mxu0 0.0
  %930 = vmatprep.subr.mxu0 0.0
  %931 = vmatpush1.msra.mxu0 0.0
  %932 = vmatprep.subr.mxu0 0.0
  %933 = vmatpush1.msra.mxu0 0.0
  %934 = vmatprep.subr.mxu0 0.0
  %935 = vmatpush1.msra.mxu0 0.0
  %936 = vmatprep.subr.mxu0 0.0
  %937 = vmatpush1.msra.mxu0 0.0
  %938 = vmatprep.subr.mxu0 0.0
  %939 = vmatpush1.msra.mxu0 0.0
  %940 = vmatprep.subr.mxu0 0.0
  %941 = vmatpush1.msra.mxu0 0.0
  %942 = vmatprep.mubr.f32.mxu0 0.0
  %943 = vmatmul.mubr.f32.gmra.mrb[0].mxu0 %v770
  %v944 = vpop.f32.mrb[0].mxu0
  %v945 = vadd.f32 0.0, %v944
  %v946 = vpop.f32.mrb[0].mxu0
  %v947 = vadd.f32 0.0, %v946
  %948 = vmatprep.mubr.f32.mxu0 0.0
  %949 = vmatmul.mubr.f32.gmra.mrb[0].mxu0 %v773
  %v950 = vpop.f32.mrb[0].mxu0
  %v951 = vadd.f32 0.0, %v950
  %v952 = vpop.f32.mrb[0].mxu0
  %v953 = vadd.f32 0.0, %v952
  %954 = vmatprep.mubr.f32.mxu0 0.0
  %955 = vmatmul.mubr.f32.gmra.mrb[0].mxu0 %v776
  %v956 = vpop.f32.mrb[0].mxu0
  %v957 = vadd.f32 0.0, %v956
  %v958 = vpop.f32.mrb[0].mxu0
  %v959 = vadd.f32 0.0, %v958
  %960 = vmatprep.mubr.f32.mxu0 0.0
  %961 = vmatmul.mubr.f32.gmra.mrb[0].mxu0 %v779
  %v962 = vpop.f32.mrb[0].mxu0
  %v963 = vadd.f32 0.0, %v962
  %v964 = vpop.f32.mrb[0].mxu0
  %v965 = vadd.f32 0.0, %v964
  %966 = vdwg.mxu0
  %v967 = vmul.f32 %v248, %v856
  %v968 = vmul.f32 %v249, %v858
  %v969 = vmul.f32 %v250, %v945
  %v970 = vmul.f32 %v251, %v947
  %v971 = vmul.f32 %v252, %v862
  %v972 = vmul.f32 %v253, %v864
  %v973 = vmul.f32 %v254, %v951
  %v974 = vmul.f32 %v255, %v953
  %v975 = vmul.f32 %v256, %v868
  %v976 = vmul.f32 %v257, %v870
  %v977 = vmul.f32 %v258, %v957
  %v978 = vmul.f32 %v259, %v959
  %v979 = vmul.f32 %v260, %v874
  %v980 = vmul.f32 %v261, %v876
  %v981 = vmul.f32 %v262, %v963
  %v982 = vmul.f32 %v263, %v965
  %v983 = vld [vmem:[%s5] sm:$0xff]
  %v984 = vld [vmem:[%s5 + $0x8] sm:$0xff]
  %v985 = vld [vmem:[%s5 + $0x10] sm:$0xff]
  %v986 = vld [vmem:[%s5 + $0x18] sm:$0xff]
  %988 = vset.pattern.permute.xlu0 32
  %989 = vperm.xlu0 %988, %v983
  %v990 = vpop.permute.xlu0 %989
  %993 = vset.pattern.permute.xlu0 32
  %994 = vperm.xlu0 %993, %v984
  %v995 = vpop.permute.xlu0 %994
  %998 = vset.pattern.permute.xlu0 32
  %999 = vperm.xlu0 %998, %v985
  %v1000 = vpop.permute.xlu0 %999
  %1003 = vset.pattern.permute.xlu0 32
  %1004 = vperm.xlu0 %1003, %v986
  %v1005 = vpop.permute.xlu0 %1004
  %vm1007 = vcmask 261120
  %v1008 = vsel %vm1007, %v983, 0
  %v1010 = vsel %vm1007, %v984, 0
  %v1012 = vsel %vm1007, %v985, 0
  %v1014 = vsel %vm1007, %v986, 0
  %1016 = vmatprep.subr.mxu0 %v968
  %1017 = vmatpush1.msra.mxu0 %v967
  %1018 = vmatprep.subr.mxu0 %v972
  %1019 = vmatpush1.msra.mxu0 %v971
  %1020 = vmatprep.subr.mxu0 %v976
  %1021 = vmatpush1.msra.mxu0 %v975
  %1022 = vmatprep.subr.mxu0 %v980
  %1023 = vmatpush1.msra.mxu0 %v979
  %1024 = vmatprep.subr.mxu0 0.0
  %1025 = vmatpush1.msra.mxu0 0.0
  %1026 = vmatprep.subr.mxu0 0.0
  %1027 = vmatpush1.msra.mxu0 0.0
  %1028 = vmatprep.subr.mxu0 0.0
  %1029 = vmatpush1.msra.mxu0 0.0
  %1030 = vmatprep.subr.mxu0 0.0
  %1031 = vmatpush1.msra.mxu0 0.0
  %1032 = vmatprep.subr.mxu0 0.0
  %1033 = vmatpush1.msra.mxu0 0.0
  %1034 = vmatprep.subr.mxu0 0.0
  %1035 = vmatpush1.msra.mxu0 0.0
  %1036 = vmatprep.subr.mxu0 0.0
  %1037 = vmatpush1.msra.mxu0 0.0
  %1038 = vmatprep.subr.mxu0 0.0
  %1039 = vmatpush1.msra.mxu0 0.0
  %1040 = vmatprep.subr.mxu0 0.0
  %1041 = vmatpush1.msra.mxu0 0.0
  %1042 = vmatprep.subr.mxu0 0.0
  %1043 = vmatpush1.msra.mxu0 0.0
  %1044 = vmatprep.subr.mxu0 0.0
  %1045 = vmatpush1.msra.mxu0 0.0
  %1046 = vmatprep.subr.mxu0 0.0
  %1047 = vmatpush1.msra.mxu0 0.0
  %1048 = vmatprep.subr.mxu0 0.0
  %1049 = vmatpush1.msra.mxu0 0.0
  %1050 = vmatprep.subr.mxu0 0.0
  %1051 = vmatpush1.msra.mxu0 0.0
  %1052 = vmatprep.subr.mxu0 0.0
  %1053 = vmatpush1.msra.mxu0 0.0
  %1054 = vmatprep.subr.mxu0 0.0
  %1055 = vmatpush1.msra.mxu0 0.0
  %1056 = vmatprep.subr.mxu0 0.0
  %1057 = vmatpush1.msra.mxu0 0.0
  %1058 = vmatprep.subr.mxu0 0.0
  %1059 = vmatpush1.msra.mxu0 0.0
  %1060 = vmatprep.subr.mxu0 0.0
  %1061 = vmatpush1.msra.mxu0 0.0
  %1062 = vmatprep.subr.mxu0 0.0
  %1063 = vmatpush1.msra.mxu0 0.0
  %1064 = vmatprep.subr.mxu0 0.0
  %1065 = vmatpush1.msra.mxu0 0.0
  %1066 = vmatprep.subr.mxu0 0.0
  %1067 = vmatpush1.msra.mxu0 0.0
  %1068 = vmatprep.subr.mxu0 0.0
  %1069 = vmatpush1.msra.mxu0 0.0
  %1070 = vmatprep.subr.mxu0 0.0
  %1071 = vmatpush1.msra.mxu0 0.0
  %1072 = vmatprep.subr.mxu0 0.0
  %1073 = vmatpush1.msra.mxu0 0.0
  %1074 = vmatprep.subr.mxu0 0.0
  %1075 = vmatpush1.msra.mxu0 0.0
  %1076 = vmatprep.subr.mxu0 0.0
  %1077 = vmatpush1.msra.mxu0 0.0
  %1078 = vmatprep.subr.mxu0 0.0
  %1079 = vmatpush1.msra.mxu0 0.0
  %1080 = vmatprep.mubr.f32.mxu0 0.0
  %1081 = vmatmul.mubr.f32.gmra.mrb[0].mxu0 %v1008
  %v1082 = vpop.f32.mrb[0].mxu0
  %v1083 = vadd.f32 %v990, %v1082
  %v1084 = vpop.f32.mrb[0].mxu0
  %v1085 = vadd.f32 %v990, %v1084
  %1086 = vmatprep.mubr.f32.mxu0 0.0
  %1087 = vmatmul.mubr.f32.gmra.mrb[0].mxu0 %v1010
  %v1088 = vpop.f32.mrb[0].mxu0
  %v1089 = vadd.f32 %v995, %v1088
  %v1090 = vpop.f32.mrb[0].mxu0
  %v1091 = vadd.f32 %v995, %v1090
  %1092 = vmatprep.mubr.f32.mxu0 0.0
  %1093 = vmatmul.mubr.f32.gmra.mrb[0].mxu0 %v1012
  %v1094 = vpop.f32.mrb[0].mxu0
  %v1095 = vadd.f32 %v1000, %v1094
  %v1096 = vpop.f32.mrb[0].mxu0
  %v1097 = vadd.f32 %v1000, %v1096
  %1098 = vmatprep.mubr.f32.mxu0 0.0
  %1099 = vmatmul.mubr.f32.gmra.mrb[0].mxu0 %v1014
  %v1100 = vpop.f32.mrb[0].mxu0
  %v1101 = vadd.f32 %v1005, %v1100
  %v1102 = vpop.f32.mrb[0].mxu0
  %v1103 = vadd.f32 %v1005, %v1102
  %1104 = vdwg.mxu0
  %1105 = vmatprep.subr.mxu0 %v970
  %1106 = vmatpush1.msra.mxu0 %v969
  %1107 = vmatprep.subr.mxu0 %v974
  %1108 = vmatpush1.msra.mxu0 %v973
  %1109 = vmatprep.subr.mxu0 %v978
  %1110 = vmatpush1.msra.mxu0 %v977
  %1111 = vmatprep.subr.mxu0 %v982
  %1112 = vmatpush1.msra.mxu0 %v981
  %1113 = vmatprep.subr.mxu0 0.0
  %1114 = vmatpush1.msra.mxu0 0.0
  %1115 = vmatprep.subr.mxu0 0.0
  %1116 = vmatpush1.msra.mxu0 0.0
  %1117 = vmatprep.subr.mxu0 0.0
  %1118 = vmatpush1.msra.mxu0 0.0
  %1119 = vmatprep.subr.mxu0 0.0
  %1120 = vmatpush1.msra.mxu0 0.0
  %1121 = vmatprep.subr.mxu0 0.0
  %1122 = vmatpush1.msra.mxu0 0.0
  %1123 = vmatprep.subr.mxu0 0.0
  %1124 = vmatpush1.msra.mxu0 0.0
  %1125 = vmatprep.subr.mxu0 0.0
  %1126 = vmatpush1.msra.mxu0 0.0
  %1127 = vmatprep.subr.mxu0 0.0
  %1128 = vmatpush1.msra.mxu0 0.0
  %1129 = vmatprep.subr.mxu0 0.0
  %1130 = vmatpush1.msra.mxu0 0.0
  %1131 = vmatprep.subr.mxu0 0.0
  %1132 = vmatpush1.msra.mxu0 0.0
  %1133 = vmatprep.subr.mxu0 0.0
  %1134 = vmatpush1.msra.mxu0 0.0
  %1135 = vmatprep.subr.mxu0 0.0
  %1136 = vmatpush1.msra.mxu0 0.0
  %1137 = vmatprep.subr.mxu0 0.0
  %1138 = vmatpush1.msra.mxu0 0.0
  %1139 = vmatprep.subr.mxu0 0.0
  %1140 = vmatpush1.msra.mxu0 0.0
  %1141 = vmatprep.subr.mxu0 0.0
  %1142 = vmatpush1.msra.mxu0 0.0
  %1143 = vmatprep.subr.mxu0 0.0
  %1144 = vmatpush1.msra.mxu0 0.0
  %1145 = vmatprep.subr.mxu0 0.0
  %1146 = vmatpush1.msra.mxu0 0.0
  %1147 = vmatprep.subr.mxu0 0.0
  %1148 = vmatpush1.msra.mxu0 0.0
  %1149 = vmatprep.subr.mxu0 0.0
  %1150 = vmatpush1.msra.mxu0 0.0
  %1151 = vmatprep.subr.mxu0 0.0
  %1152 = vmatpush1.msra.mxu0 0.0
  %1153 = vmatprep.subr.mxu0 0.0
  %1154 = vmatpush1.msra.mxu0 0.0
  %1155 = vmatprep.subr.mxu0 0.0
  %1156 = vmatpush1.msra.mxu0 0.0
  %1157 = vmatprep.subr.mxu0 0.0
  %1158 = vmatpush1.msra.mxu0 0.0
  %1159 = vmatprep.subr.mxu0 0.0
  %1160 = vmatpush1.msra.mxu0 0.0
  %1161 = vmatprep.subr.mxu0 0.0
  %1162 = vmatpush1.msra.mxu0 0.0
  %1163 = vmatprep.subr.mxu0 0.0
  %1164 = vmatpush1.msra.mxu0 0.0
  %1165 = vmatprep.subr.mxu0 0.0
  %1166 = vmatpush1.msra.mxu0 0.0
  %1167 = vmatprep.subr.mxu0 0.0
  %1168 = vmatpush1.msra.mxu0 0.0
  %1169 = vmatprep.mubr.f32.mxu0 0.0
  %1170 = vmatmul.mubr.f32.gmra.mrb[0].mxu0 %v1008
  %v1171 = vpop.f32.mrb[0].mxu0
  %v1172 = vadd.f32 %v990, %v1171
  %v1173 = vpop.f32.mrb[0].mxu0
  %v1174 = vadd.f32 %v990, %v1173
  %1175 = vmatprep.mubr.f32.mxu0 0.0
  %1176 = vmatmul.mubr.f32.gmra.mrb[0].mxu0 %v1010
  %v1177 = vpop.f32.mrb[0].mxu0
  %v1178 = vadd.f32 %v995, %v1177
  %v1179 = vpop.f32.mrb[0].mxu0
  %v1180 = vadd.f32 %v995, %v1179
  %1181 = vmatprep.mubr.f32.mxu0 0.0
  %1182 = vmatmul.mubr.f32.gmra.mrb[0].mxu0 %v1012
  %v1183 = vpop.f32.mrb[0].mxu0
  %v1184 = vadd.f32 %v1000, %v1183
  %v1185 = vpop.f32.mrb[0].mxu0
  %v1186 = vadd.f32 %v1000, %v1185
  %1187 = vmatprep.mubr.f32.mxu0 0.0
  %1188 = vmatmul.mubr.f32.gmra.mrb[0].mxu0 %v1014
  %v1189 = vpop.f32.mrb[0].mxu0
  %v1190 = vadd.f32 %v1005, %v1189
  %v1191 = vpop.f32.mrb[0].mxu0
  %v1192 = vadd.f32 %v1005, %v1191
  %1193 = vdwg.mxu0
  %1194 = vst [vmem:[%s6] sm:$0xff] %v1083
  %1195 = vst [vmem:[%s6 + $0x8] sm:$0xff] %v1085
  %1196 = vst [vmem:[%s6 + $0x10] sm:$0xff] %v1089
  %1197 = vst [vmem:[%s6 + $0x18] sm:$0xff] %v1091
  %1198 = vst [vmem:[%s6 + $0x20] sm:$0xff] %v1095
  %1199 = vst [vmem:[%s6 + $0x28] sm:$0xff] %v1097
  %1200 = vst [vmem:[%s6 + $0x30] sm:$0xff] %v1101
  %1201 = vst [vmem:[%s6 + $0x38] sm:$0xff] %v1103
  %s1202 = scalar_lea.vmem %s6, 64
  %1203 = vst [vmem:[%s1202] sm:$0xff] %v1172
  %1204 = vst [vmem:[%s1202 + $0x8] sm:$0xff] %v1174
  %1205 = vst [vmem:[%s1202 + $0x10] sm:$0xff] %v1178
  %1206 = vst [vmem:[%s1202 + $0x18] sm:$0xff] %v1180
  %1207 = vst [vmem:[%s1202 + $0x20] sm:$0xff] %v1184
  %1208 = vst [vmem:[%s1202 + $0x28] sm:$0xff] %v1186
  %1209 = vst [vmem:[%s1202 + $0x30] sm:$0xff] %v1190
  %1210 = vst [vmem:[%s1202 + $0x38] sm:$0xff] %v1192
  // Predicated region
  $region26: #{mbh_pallas.1} parent=0 // pred_check
    _
  $region27: #{mbh_pallas.1} parent=0 // pred_check_branch
    %1212 = sbr.rel (0) target = $region29
  $region28: #{mbh_pallas.1} parent=0 // pred_region
    _
  $region29: #{mbh_pallas.1} parent=0 // pred_fallthru
    _
  // Predicated region
  $region30: #{mbh_pallas.1} parent=0 // pred_check
    _
  $region31: #{mbh_pallas.1} parent=0 // pred_check_branch
    %1214 = sbr.rel (0) target = $region33
  $region32: #{mbh_pallas.1} parent=0 // pred_region
    _
  $region33: #{mbh_pallas.1} parent=0 // pred_fallthru
    _

</llo_original>
